<compile_context>
chip_gen: v6e
topology: v6e:2x2x1
jax: 0.10.0
libtpu: 0.0.40
codegen_flags: <defaults>
</compile_context>

<pallas_src>
import jax
import jax.numpy as jnp
from jax.experimental import pallas as pl
from jax.experimental.pallas import tpu as pltpu

_LANES = 1024        # lane-dense last dim (multiple of 128)
_BLOCK_ROWS = 1024   # row tile (multiple of 8); 1024x1024 f32 = 4 MiB / block


def _make_scale_kernel(scale: float):
    def kernel(x_ref, o_ref):
        # `scale` is a weakly-typed Python float constant: the multiply stays in
        # x.dtype, folds into a single VPU op, and needs no SMEM scalar DMA.
        o_ref[...] = x_ref[...] * scale
    return kernel


def dropout_scaling(x: jax.Array, p: float) -> jax.Array:
    """Elementwise scaling by 1/(1-p), computed in a Pallas TPU kernel."""
    scale = 1.0 / (1.0 - p)  # static Python float; not pre-rounded to x.dtype
    orig_shape = x.shape
    total = int(x.size)
    if total == 0:
        return x

    # Flatten and reshape to a lane-dense 2-D slab (rows, _LANES).
    flat = x.reshape(-1)
    pad = (-total) % _LANES
    if pad:
        flat = jnp.pad(flat, (0, pad))
    rows = flat.size // _LANES
    x2d = flat.reshape(rows, _LANES)

    # Row tile: multiple of 8 for big inputs, or the full row extent for small ones.
    block_rows = _BLOCK_ROWS if rows >= _BLOCK_ROWS else rows
    grid = (pl.cdiv(rows, block_rows),)

    out2d = pl.pallas_call(
        _make_scale_kernel(scale),
        out_shape=jax.ShapeDtypeStruct((rows, _LANES), x.dtype),
        grid_spec=pltpu.PrefetchScalarGridSpec(
            num_scalar_prefetch=0,
            grid=grid,
            in_specs=[pl.BlockSpec((block_rows, _LANES), lambda i: (i, 0))],
            out_specs=pl.BlockSpec((block_rows, _LANES), lambda i: (i, 0)),
        ),
        compiler_params=pltpu.CompilerParams(
            # Every tile is independent -> allow megacore sharding (v7x).
            dimension_semantics=("parallel",),
            # 4 MiB/block * (in + out) * double-buffer = 16 MiB; raise v5e's
            # 16 MiB default scoped limit, still <= physical VMEM on all gens.
            vmem_limit_bytes=32 * 1024 * 1024,
        ),
    )(x2d)

    out = out2d.reshape(-1)
    if pad:
        out = out[:total]
    return out.reshape(orig_shape)


if __name__ == "__main__":
    p = 0.25  # dropout probability -> scale = 1 / (1 - 0.25) = 4/3
    key = jax.random.PRNGKey(0)

    # Main example (NCHW, total elements a multiple of the lane width).
    x = jax.random.normal(key, (2, 4, 16, 16), dtype=jnp.float32)
    y = jax.block_until_ready(dropout_scaling(x, p))
    y_ref = x * (1.0 / (1.0 - p))
    assert y.shape == x.shape and y.dtype == x.dtype
    assert jnp.allclose(y, y_ref, rtol=1e-6, atol=1e-6)

    # Ragged-tail example (total not a multiple of 1024 -> padding path).
    x2 = jax.random.normal(jax.random.PRNGKey(1), (3, 5, 7), dtype=jnp.float32)
    y2 = jax.block_until_ready(dropout_scaling(x2, p))
    assert y2.shape == x2.shape and y2.dtype == x2.dtype
    assert jnp.allclose(y2, x2 * (1.0 / (1.0 - p)), rtol=1e-6, atol=1e-6)

    print("KERNEL_OK")
</pallas_src>

<mosaic_0001>
module attributes {stable_mosaic.version = 11 : i64} {
  func.func @kernel(%arg0: i32, %arg1: memref<2x1024xf32, #tpu.memory_space<vmem>>, %arg2: memref<2x1024xf32, #tpu.memory_space<vmem>>) attributes {dimension_semantics = [#tpu.dimension_semantics<parallel>], iteration_bounds = array<i64: 1>, scalar_prefetch = 0 : i64, scratch_operands = 0 : i64, tpu.core_type = #tpu.core_type<tc>, window_params = [{transform_indices = @transform_0, window_bounds = array<i64: 2, 1024>}, {transform_indices = @transform_1, window_bounds = array<i64: 2, 1024>}]} {
    %c0 = arith.constant 0 : index
    %c0_0 = arith.constant 0 : index
    %0 = vector.load %arg1[%c0, %c0_0] : memref<2x1024xf32, #tpu.memory_space<vmem>>, vector<2x1024xf32>
    %cst = arith.constant 1.33333337 : f32
    %1 = vector.broadcast %cst : f32 to vector<2x1024xf32>
    %2 = arith.mulf %0, %1 : vector<2x1024xf32>
    %c0_1 = arith.constant 0 : index
    %c0_2 = arith.constant 0 : index
    %3 = vector.load %arg2[%c0_1, %c0_2] : memref<2x1024xf32, #tpu.memory_space<vmem>>, vector<2x1024xf32>
    tpu.vector_store %arg2[%c0_1, %c0_2], %2 {strides = array<i32>} : memref<2x1024xf32, #tpu.memory_space<vmem>>, vector<2x1024xf32>,
    return
  }
  func.func @transform_0(%arg0: i32) -> (i32, i32) {
    %c0_i32 = arith.constant 0 : i32
    %c0_i32_0 = arith.constant 0 : i32
    return %arg0, %c0_i32 : i32, i32
  }
  func.func @transform_1(%arg0: i32) -> (i32, i32) {
    %c0_i32 = arith.constant 0 : i32
    %c0_i32_0 = arith.constant 0 : i32
    return %arg0, %c0_i32 : i32, i32
  }
}

</mosaic_0001>

<llo_original>
// kernel: tpu_custom_call.1
$region0: #{tpu_custom_call.1}
  #allocation0 [shape = 'u32[]', space=smem, size = 0x4, offset = 0x4, fixed_abs, tag = 'smem constant byte address 0x4 - core index']
  #allocation1 [shape = 'u32[144,128]{1,0:T(1,128)}', space=vmem, size = 0x12000, scoped, tag = 'internal scratch']
  %s0 = inlined_call_operand.hbm [shape: f32[2,1024], index: 0, kind: input, shape index: {}]
  %s1 = inlined_call_operand.hbm [shape: f32[2,1024], index: 1, kind: output, shape index: {}]
  %s2 = sld [smem:[#allocation0]]
  $region18: #{tpu_custom_call.1} parent=0
    _
  %s4 = ssub.s32 1, %s2
  %s5 = scalar_select 0, %s4, %s2
  $region1: #{tpu_custom_call.1} parent=0
    #allocation2 [shape = 'u8[8192]{0}', space=vmem, size = 0x2000, scoped, tag = 'input window, operand 0, single buffered']
    #allocation3 [shape = 's32[1]{0}', space=sflag, size = 0x4, scoped, tag = 'scoped memory for tpu_custom_call.1']
    #allocation4 [shape = 's32[1]{0}', space=sflag, size = 0x4, scoped, tag = 'scoped memory for tpu_custom_call.1']
    #allocation5 [shape = 'u8[8192]{0}', space=vmem, size = 0x2000, scoped, tag = 'output window, operand 0, single buffered']
    %6 = vsyncpa [#allocation3], 0
    %7 = vsyncpa [#allocation4], 0
    // Predicated region
    $region2: #{tpu_custom_call.1} parent=1 // pred_check
      _
    $region3: #{tpu_custom_call.1} parent=1 // pred_check_branch
      %9 = sbr.rel (0) target = $region5
    $region4: #{tpu_custom_call.1} parent=1 // pred_region
      %s11 = ssub.s32 256, 256
      %12 = vsyncadd [#allocation3], %s11
      %s14 = sshll.u32 [#allocation2], 4
      %s15 = int_to_ptr.vmem [resolvable:$true] %s14
      %17 = dma.hbm_to_vmem [thread:$0]  %s0, 256, %s15, [#allocation3]
    $region5: #{tpu_custom_call.1} parent=1 // pred_fallthru
      _
    // Predicated region
    $region6: #{tpu_custom_call.1} parent=1 // pred_check
      _
    $region7: #{tpu_custom_call.1} parent=1 // pred_check_branch
      %19 = sbr.rel (0) target = $region9
    $region8: #{tpu_custom_call.1} parent=1 // pred_region
      %20 = dma.done [#allocation3], 256
    $region9: #{tpu_custom_call.1} parent=1 // pred_fallthru
      _
    %v21 = vld [vmem:[#allocation2] sm:$0xff]
    %v22 = vld [vmem:[#allocation2 + $0x8] sm:$0xff]
    %v23 = vmul.f32 %v21, 1.3333334
    %v24 = vmul.f32 %v22, 1.3333334
    %25 = vst [vmem:[#allocation5] sm:$0xff] %v23
    %26 = vst [vmem:[#allocation5 + $0x8] sm:$0xff] %v24
    // Predicated region
    $region10: #{tpu_custom_call.1} parent=1 // pred_check
      _
    $region11: #{tpu_custom_call.1} parent=1 // pred_check_branch
      %28 = sbr.rel (0) target = $region13
    $region12: #{tpu_custom_call.1} parent=1 // pred_region
      %s30 = ssub.s32 256, 256
      %31 = vsyncadd [#allocation4], %s30
      %s33 = sshll.u32 [#allocation5], 4
      %s34 = int_to_ptr.vmem [resolvable:$true] %s33
      %36 = dma.vmem_to_hbm [thread:$0]  %s34, 256, %s1, [#allocation4]
    $region13: #{tpu_custom_call.1} parent=1 // pred_fallthru
      _
    // Predicated region
    $region14: #{tpu_custom_call.1} parent=1 // pred_check
      _
    $region15: #{tpu_custom_call.1} parent=1 // pred_check_branch
      %38 = sbr.rel (0) target = $region17
    $region16: #{tpu_custom_call.1} parent=1 // pred_region
      %39 = dma.done [#allocation4], 256
    $region17: #{tpu_custom_call.1} parent=1 // pred_fallthru
      _
    %40 = vsyncpa [#allocation3], 1
    %41 = vsyncpa [#allocation4], 1

</llo_original>
